<compile_context>
chip_gen: v6e
topology: v6e:2x2x1
jax: 0.10.0
libtpu: 0.0.40
codegen_flags: <defaults>
</compile_context>

<pallas_src>
import functools

import jax
import jax.numpy as jnp
from jax.experimental import pallas as pl
from jax.experimental.pallas import tpu as pltpu


def _cdiv(a, b):
    return -(-a // b)


def _round_up(a, b):
    return _cdiv(a, b) * b


_SQRT_2_OVER_PI = 0.7978845608028654
_INV_SQRT_2 = 0.7071067811865476


def _gelu_tanh(x):
    # tanh-approximate GELU: transcendental goes to the (otherwise idle) EUP slot
    # instead of a multi-FMA erf polynomial on the VALU.  Math kept in f32.
    return 0.5 * x * (1.0 + jnp.tanh(_SQRT_2_OVER_PI * (x + 0.044715 * (x * x * x))))


def _gelu_erf(x):
    # PyTorch nn.GELU default (exact): 0.5 * x * (1 + erf(x / sqrt(2)))
    return 0.5 * x * (1.0 + jax.lax.erf(x * _INV_SQRT_2))


def sinet_kernel(x_ref, wfc_ref, bfc_ref, w1_ref, b1_ref, w2_ref, b2_ref,
                 w3_ref, b3_ref, o_ref, *, exact_gelu):
    gelu = _gelu_erf if exact_gelu else _gelu_tanh

    # Hoist bias loads: one load each per grid step (JAX does not CSE broadcasts).
    bfc = bfc_ref[...]
    b1 = b1_ref[...]
    b2 = b2_ref[...]
    b3 = b3_ref[...]

    # fc: bf16 operands, f32 accumulation on the MXU.
    x = x_ref[...]                                                     # bf16 tile
    h = jnp.dot(x, wfc_ref[...], preferred_element_type=jnp.float32) + bfc

    # ResidualBlockFC: GELU -> Linear -> GELU -> Linear -> GELU -> Linear
    a = gelu(h).astype(jnp.bfloat16)
    a = jnp.dot(a, w1_ref[...], preferred_element_type=jnp.float32) + b1
    a = gelu(a).astype(jnp.bfloat16)
    a = jnp.dot(a, w2_ref[...], preferred_element_type=jnp.float32) + b2
    a = gelu(a).astype(jnp.bfloat16)
    a = jnp.dot(a, w3_ref[...], preferred_element_type=jnp.float32) + b3

    # Residual add in f32; lane-dense store (d_out chosen as a multiple of 128).
    o_ref[...] = (h + a).astype(o_ref.dtype)
    # TODO(synk): for d_out not a multiple of 128, pack pairs of rows into a
    # (tm//2, 2*d_out) lane-dense slab before storing to avoid masked vst stores.


@functools.partial(jax.jit, static_argnames=("tm", "exact_gelu"))
def sinet_pallas(x, params, *, tm=512, exact_gelu=False):
    """x: [N, d_in] float32.  params: dict of pre-transposed [in, out] weights + [1, out] biases."""
    N, d_in = x.shape
    d_out = params["wfc"].shape[1]
    d_res = params["w1"].shape[1]

    # --- row-tile selection ---------------------------------------------------
    tm_eff = max(8, min(tm, _round_up(N, 8)))
    tm_eff = _round_up(tm_eff, 8)
    # v7x has 2 TensorCores; keep the "parallel" grid axis >= 2 steps when there
    # is enough work so both cores get a share (harmless on single-TC v5e/v6e).
    if _cdiv(N, tm_eff) < 2 and N > 16:
        tm_eff = _round_up(_cdiv(N, 2), 8)
    n_pad = _round_up(N, tm_eff)
    grid = n_pad // tm_eff

    # --- operand prep: pad ragged batch, bf16 matmul operands ------------------
    xp = x
    if n_pad != N:
        xp = jnp.pad(xp, ((0, n_pad - N), (0, 0)))
    xp = xp.astype(jnp.bfloat16)                       # half the activation DMA
    w = lambda k: params[k].astype(jnp.bfloat16)       # bf16 weights: MXU-native, half DMA/VMEM
    b = lambda k: params[k].astype(jnp.float32)        # biases stay f32

    full = lambda shape: pl.BlockSpec(shape, lambda i: (0,) * len(shape))

    out = pl.pallas_call(
        functools.partial(sinet_kernel, exact_gelu=exact_gelu),
        out_shape=jax.ShapeDtypeStruct((n_pad, d_out), jnp.float32),
        grid_spec=pltpu.PrefetchScalarGridSpec(
            num_scalar_prefetch=0,
            grid=(grid,),
            in_specs=[
                pl.BlockSpec((tm_eff, d_in), lambda i: (i, 0)),   # x tile
                full((d_in, d_out)),                              # Wfc (constant index_map)
                full((1, d_out)),                                 # bfc
                full((d_out, d_res)),                             # W1
                full((1, d_res)),                                 # b1
                full((d_res, d_res)),                             # W2
                full((1, d_res)),                                 # b2
                full((d_res, d_out)),                             # W3
                full((1, d_out)),                                 # b3
            ],
            out_specs=pl.BlockSpec((tm_eff, d_out), lambda i: (i, 0)),
        ),
        compiler_params=pltpu.CompilerParams(
            dimension_semantics=("parallel",),
            # Only raise the scoped VMEM limit when the row tile is large enough
            # to need it (keeps the default on v7x's 64 MiB part otherwise).
            vmem_limit_bytes=(64 * 1024 * 1024) if tm_eff > 2048 else None,
        ),
    )(xp, w("wfc"), b("bfc"), w("w1"), b("b1"), w("w2"), b("b2"), w("w3"), b("b3"))

    return out if n_pad == N else out[:N]


def init_params(key, d_in, d_out, d_res):
    """Deterministic init mimicking nn.Linear's U(-1/sqrt(fan_in), 1/sqrt(fan_in)).
    Weights stored pre-transposed as [in, out]."""
    ks = jax.random.split(key, 8)

    def lin(kw, kb, fan_in, fan_out):
        bound = 1.0 / jnp.sqrt(float(fan_in))
        w = jax.random.uniform(kw, (fan_in, fan_out), jnp.float32, -bound, bound)
        b = jax.random.uniform(kb, (1, fan_out), jnp.float32, -bound, bound)
        return w, b

    wfc, bfc = lin(ks[0], ks[1], d_in, d_out)
    w1, b1 = lin(ks[2], ks[3], d_out, d_res)
    w2, b2 = lin(ks[4], ks[5], d_res, d_res)
    w3, b3 = lin(ks[6], ks[7], d_res, d_out)
    return dict(wfc=wfc, bfc=bfc, w1=w1, b1=b1, w2=w2, b2=b2, w3=w3, b3=b3)


def sinet_reference(x, p):
    """Pure-JAX f32 reference with PyTorch's exact-erf GELU."""
    g = lambda t: jax.nn.gelu(t, approximate=False)
    h = x @ p["wfc"] + p["bfc"]
    a = g(h) @ p["w1"] + p["b1"]
    a = g(a) @ p["w2"] + p["b2"]
    a = g(a) @ p["w3"] + p["b3"]
    return h + a


def sinet_reference_matched(x, p):
    """Reference mirroring the kernel numerics: bf16 matmul operands, f32 accum, tanh GELU."""
    bf = jnp.bfloat16
    mm = lambda a, w: jnp.dot(a.astype(bf), w.astype(bf), preferred_element_type=jnp.float32)
    g = lambda t: jax.nn.gelu(t, approximate=True)
    h = mm(x, p["wfc"]) + p["bfc"]
    a = mm(g(h), p["w1"]) + p["b1"]
    a = mm(g(a), p["w2"]) + p["b2"]
    a = mm(g(a), p["w3"]) + p["b3"]
    return h + a


if __name__ == "__main__":
    # Small, lane-dense dims consistent with the module (d_in/d_out/d_res are
    # constructor params).  N is deliberately NOT a multiple of the tile to
    # exercise the padding + multi-step-grid path.
    d_in, d_out, d_res = 128, 128, 256
    N = 40

    key = jax.random.PRNGKey(0)
    kx, kp = jax.random.split(key)
    x = jax.random.normal(kx, (N, d_in), dtype=jnp.float32)
    params = init_params(kp, d_in, d_out, d_res)

    out = jax.block_until_ready(sinet_pallas(x, params))            # default tm (auto grid split)
    out_tiled = jax.block_until_ready(sinet_pallas(x, params, tm=16))  # explicit multi-step grid

    ref_exact = sinet_reference(x, params)
    ref_match = sinet_reference_matched(x, params)

    assert out.shape == (N, d_out)
    err_exact = float(jnp.max(jnp.abs(out - ref_exact)))
    err_match = float(jnp.max(jnp.abs(out - ref_match)))
    err_tiles = float(jnp.max(jnp.abs(out - out_tiled)))
    # Loose check vs the exact-f32/erf reference (bf16 matmuls + tanh GELU deviate slightly).
    assert jnp.allclose(out, ref_exact, atol=5e-2, rtol=5e-2), err_exact
    # Tight check vs the numerics-matched reference.
    assert jnp.allclose(out, ref_match, atol=2e-3, rtol=2e-3), err_match
    # Tiling must not change results.
    assert jnp.allclose(out, out_tiled, atol=2e-3, rtol=2e-3), err_tiles

    print("KERNEL_OK")
</pallas_src>

<mosaic_0001>
module attributes {stable_mosaic.version = 11 : i64} {
  func.func @sinet_kernel(%arg0: i32, %arg1: memref<24x128xbf16, #tpu.memory_space<vmem>>, %arg2: memref<128x128xbf16, #tpu.memory_space<vmem>>, %arg3: memref<1x128xf32, #tpu.memory_space<vmem>>, %arg4: memref<128x256xbf16, #tpu.memory_space<vmem>>, %arg5: memref<1x256xf32, #tpu.memory_space<vmem>>, %arg6: memref<256x256xbf16, #tpu.memory_space<vmem>>, %arg7: memref<1x256xf32, #tpu.memory_space<vmem>>, %arg8: memref<256x128xbf16, #tpu.memory_space<vmem>>, %arg9: memref<1x128xf32, #tpu.memory_space<vmem>>, %arg10: memref<24x128xf32, #tpu.memory_space<vmem>>) attributes {dimension_semantics = [#tpu.dimension_semantics<parallel>], iteration_bounds = array<i64: 2>, scalar_prefetch = 0 : i64, scratch_operands = 0 : i64, tpu.core_type = #tpu.core_type<tc>, window_params = [{transform_indices = @transform_0, window_bounds = array<i64: 24, 128>}, {pipeline_mode = #tpu.pipeline_mode<synchronous>, transform_indices = @transform_1, window_bounds = array<i64: 128, 128>}, {pipeline_mode = #tpu.pipeline_mode<synchronous>, transform_indices = @transform_2, window_bounds = array<i64: 1, 128>}, {pipeline_mode = #tpu.pipeline_mode<synchronous>, transform_indices = @transform_3, window_bounds = array<i64: 128, 256>}, {pipeline_mode = #tpu.pipeline_mode<synchronous>, transform_indices = @transform_4, window_bounds = array<i64: 1, 256>}, {pipeline_mode = #tpu.pipeline_mode<synchronous>, transform_indices = @transform_5, window_bounds = array<i64: 256, 256>}, {pipeline_mode = #tpu.pipeline_mode<synchronous>, transform_indices = @transform_6, window_bounds = array<i64: 1, 256>}, {pipeline_mode = #tpu.pipeline_mode<synchronous>, transform_indices = @transform_7, window_bounds = array<i64: 256, 128>}, {pipeline_mode = #tpu.pipeline_mode<synchronous>, transform_indices = @transform_8, window_bounds = array<i64: 1, 128>}, {transform_indices = @transform_9, window_bounds = array<i64: 24, 128>}]} {
    %c0 = arith.constant 0 : index
    %c0_0 = arith.constant 0 : index
    %0 = vector.load %arg3[%c0, %c0_0] : memref<1x128xf32, #tpu.memory_space<vmem>>, vector<1x128xf32>
    %c0_1 = arith.constant 0 : index
    %c0_2 = arith.constant 0 : index
    %1 = vector.load %arg5[%c0_1, %c0_2] : memref<1x256xf32, #tpu.memory_space<vmem>>, vector<1x256xf32>
    %c0_3 = arith.constant 0 : index
    %c0_4 = arith.constant 0 : index
    %2 = vector.load %arg7[%c0_3, %c0_4] : memref<1x256xf32, #tpu.memory_space<vmem>>, vector<1x256xf32>
    %c0_5 = arith.constant 0 : index
    %c0_6 = arith.constant 0 : index
    %3 = vector.load %arg9[%c0_5, %c0_6] : memref<1x128xf32, #tpu.memory_space<vmem>>, vector<1x128xf32>
    %c0_7 = arith.constant 0 : index
    %c0_8 = arith.constant 0 : index
    %4 = vector.load %arg1[%c0_7, %c0_8] : memref<24x128xbf16, #tpu.memory_space<vmem>>, vector<24x128xbf16>
    %c0_9 = arith.constant 0 : index
    %c0_10 = arith.constant 0 : index
    %5 = vector.load %arg2[%c0_9, %c0_10] : memref<128x128xbf16, #tpu.memory_space<vmem>>, vector<128x128xbf16>
    %cst = arith.constant dense<0.000000e+00> : vector<24x128xf32>
    %6 = tpu.matmul %4, %5, %cst {dimension_numbers = #tpu.dot_dimension_numbers<[1], [0], [0], [1], [0, 0, 1, 1], [], []>} : vector<24x128xbf16>, vector<128x128xbf16>, vector<24x128xf32> -> vector<24x128xf32>
    %7 = vector.broadcast %0 : vector<1x128xf32> to vector<24x128xf32>
    %8 = arith.addf %6, %7 : vector<24x128xf32>
    %cst_11 = arith.constant 5.000000e-01 : f32
    %9 = vector.broadcast %cst_11 : f32 to vector<24x128xf32>
    %10 = arith.mulf %9, %8 : vector<24x128xf32>
    %11 = arith.mulf %8, %8 : vector<24x128xf32>
    %12 = arith.mulf %11, %8 : vector<24x128xf32>
    %cst_12 = arith.constant 4.471500e-02 : f32
    %13 = vector.broadcast %cst_12 : f32 to vector<24x128xf32>
    %14 = arith.mulf %13, %12 : vector<24x128xf32>
    %15 = arith.addf %8, %14 : vector<24x128xf32>
    %cst_13 = arith.constant 0.797884583 : f32
    %16 = vector.broadcast %cst_13 : f32 to vector<24x128xf32>
    %17 = arith.mulf %16, %15 : vector<24x128xf32>
    %18 = math.tanh %17 : vector<24x128xf32>
    %cst_14 = arith.constant 1.000000e+00 : f32
    %19 = vector.broadcast %cst_14 : f32 to vector<24x128xf32>
    %20 = arith.addf %19, %18 : vector<24x128xf32>
    %21 = arith.mulf %10, %20 : vector<24x128xf32>
    %22 = arith.truncf %21 : vector<24x128xf32> to vector<24x128xbf16>
    %c0_15 = arith.constant 0 : index
    %c0_16 = arith.constant 0 : index
    %23 = vector.load %arg4[%c0_15, %c0_16] : memref<128x256xbf16, #tpu.memory_space<vmem>>, vector<128x256xbf16>
    %cst_17 = arith.constant dense<0.000000e+00> : vector<24x256xf32>
    %24 = tpu.matmul %22, %23, %cst_17 {dimension_numbers = #tpu.dot_dimension_numbers<[1], [0], [0], [1], [0, 0, 1, 1], [], []>} : vector<24x128xbf16>, vector<128x256xbf16>, vector<24x256xf32> -> vector<24x256xf32>
    %25 = vector.broadcast %1 : vector<1x256xf32> to vector<24x256xf32>
    %26 = arith.addf %24, %25 : vector<24x256xf32>
    %cst_18 = arith.constant 5.000000e-01 : f32
    %27 = vector.broadcast %cst_18 : f32 to vector<24x256xf32>
    %28 = arith.mulf %27, %26 : vector<24x256xf32>
    %29 = arith.mulf %26, %26 : vector<24x256xf32>
    %30 = arith.mulf %29, %26 : vector<24x256xf32>
    %cst_19 = arith.constant 4.471500e-02 : f32
    %31 = vector.broadcast %cst_19 : f32 to vector<24x256xf32>
    %32 = arith.mulf %31, %30 : vector<24x256xf32>
    %33 = arith.addf %26, %32 : vector<24x256xf32>
    %cst_20 = arith.constant 0.797884583 : f32
    %34 = vector.broadcast %cst_20 : f32 to vector<24x256xf32>
    %35 = arith.mulf %34, %33 : vector<24x256xf32>
    %36 = math.tanh %35 : vector<24x256xf32>
    %cst_21 = arith.constant 1.000000e+00 : f32
    %37 = vector.broadcast %cst_21 : f32 to vector<24x256xf32>
    %38 = arith.addf %37, %36 : vector<24x256xf32>
    %39 = arith.mulf %28, %38 : vector<24x256xf32>
    %40 = arith.truncf %39 : vector<24x256xf32> to vector<24x256xbf16>
    %c0_22 = arith.constant 0 : index
    %c0_23 = arith.constant 0 : index
    %41 = vector.load %arg6[%c0_22, %c0_23] : memref<256x256xbf16, #tpu.memory_space<vmem>>, vector<256x256xbf16>
    %cst_24 = arith.constant dense<0.000000e+00> : vector<24x256xf32>
    %42 = tpu.matmul %40, %41, %cst_24 {dimension_numbers = #tpu.dot_dimension_numbers<[1], [0], [0], [1], [0, 0, 1, 1], [], []>} : vector<24x256xbf16>, vector<256x256xbf16>, vector<24x256xf32> -> vector<24x256xf32>
    %43 = vector.broadcast %2 : vector<1x256xf32> to vector<24x256xf32>
    %44 = arith.addf %42, %43 : vector<24x256xf32>
    %cst_25 = arith.constant 5.000000e-01 : f32
    %45 = vector.broadcast %cst_25 : f32 to vector<24x256xf32>
    %46 = arith.mulf %45, %44 : vector<24x256xf32>
    %47 = arith.mulf %44, %44 : vector<24x256xf32>
    %48 = arith.mulf %47, %44 : vector<24x256xf32>
    %cst_26 = arith.constant 4.471500e-02 : f32
    %49 = vector.broadcast %cst_26 : f32 to vector<24x256xf32>
    %50 = arith.mulf %49, %48 : vector<24x256xf32>
    %51 = arith.addf %44, %50 : vector<24x256xf32>
    %cst_27 = arith.constant 0.797884583 : f32
    %52 = vector.broadcast %cst_27 : f32 to vector<24x256xf32>
    %53 = arith.mulf %52, %51 : vector<24x256xf32>
    %54 = math.tanh %53 : vector<24x256xf32>
    %cst_28 = arith.constant 1.000000e+00 : f32
    %55 = vector.broadcast %cst_28 : f32 to vector<24x256xf32>
    %56 = arith.addf %55, %54 : vector<24x256xf32>
    %57 = arith.mulf %46, %56 : vector<24x256xf32>
    %58 = arith.truncf %57 : vector<24x256xf32> to vector<24x256xbf16>
    %c0_29 = arith.constant 0 : index
    %c0_30 = arith.constant 0 : index
    %59 = vector.load %arg8[%c0_29, %c0_30] : memref<256x128xbf16, #tpu.memory_space<vmem>>, vector<256x128xbf16>
    %cst_31 = arith.constant dense<0.000000e+00> : vector<24x128xf32>
    %60 = tpu.matmul %58, %59, %cst_31 {dimension_numbers = #tpu.dot_dimension_numbers<[1], [0], [0], [1], [0, 0, 1, 1], [], []>} : vector<24x256xbf16>, vector<256x128xbf16>, vector<24x128xf32> -> vector<24x128xf32>
    %61 = vector.broadcast %3 : vector<1x128xf32> to vector<24x128xf32>
    %62 = arith.addf %60, %61 : vector<24x128xf32>
    %63 = arith.addf %8, %62 : vector<24x128xf32>
    %c0_32 = arith.constant 0 : index
    %c0_33 = arith.constant 0 : index
    %64 = vector.load %arg10[%c0_32, %c0_33] : memref<24x128xf32, #tpu.memory_space<vmem>>, vector<24x128xf32>
    tpu.vector_store %arg10[%c0_32, %c0_33], %63 {strides = array<i32>} : memref<24x128xf32, #tpu.memory_space<vmem>>, vector<24x128xf32>,
    return
  }
  func.func @transform_0(%arg0: i32) -> (i32, i32) {
    %c0_i32 = arith.constant 0 : i32
    %c0_i32_0 = arith.constant 0 : i32
    return %arg0, %c0_i32 : i32, i32
  }
  func.func @transform_1(%arg0: i32) -> (i32, i32) {
    %c0_i32 = arith.constant 0 : i32
    %c0_i32_0 = arith.constant 0 : i32
    %c0_i32_1 = arith.constant 0 : i32
    return %c0_i32, %c0_i32_0 : i32, i32
  }
  func.func @transform_2(%arg0: i32) -> (i32, i32) {
    %c0_i32 = arith.constant 0 : i32
    %c0_i32_0 = arith.constant 0 : i32
    %c0_i32_1 = arith.constant 0 : i32
    return %c0_i32, %c0_i32_0 : i32, i32
  }
  func.func @transform_3(%arg0: i32) -> (i32, i32) {
    %c0_i32 = arith.constant 0 : i32
    %c0_i32_0 = arith.constant 0 : i32
    %c0_i32_1 = arith.constant 0 : i32
    return %c0_i32, %c0_i32_0 : i32, i32
  }
  func.func @transform_4(%arg0: i32) -> (i32, i32) {
    %c0_i32 = arith.constant 0 : i32
    %c0_i32_0 = arith.constant 0 : i32
    %c0_i32_1 = arith.constant 0 : i32
    return %c0_i32, %c0_i32_0 : i32, i32
  }
  func.func @transform_5(%arg0: i32) -> (i32, i32) {
    %c0_i32 = arith.constant 0 : i32
    %c0_i32_0 = arith.constant 0 : i32
    %c0_i32_1 = arith.constant 0 : i32
    return %c0_i32, %c0_i32_0 : i32, i32
  }
  func.func @transform_6(%arg0: i32) -> (i32, i32) {
    %c0_i32 = arith.constant 0 : i32
    %c0_i32_0 = arith.constant 0 : i32
    %c0_i32_1 = arith.constant 0 : i32
    return %c0_i32, %c0_i32_0 : i32, i32
  }
  func.func @transform_7(%arg0: i32) -> (i32, i32) {
    %c0_i32 = arith.constant 0 : i32
    %c0_i32_0 = arith.constant 0 : i32
    %c0_i32_1 = arith.constant 0 : i32
    return %c0_i32, %c0_i32_0 : i32, i32
  }
  func.func @transform_8(%arg0: i32) -> (i32, i32) {
    %c0_i32 = arith.constant 0 : i32
    %c0_i32_0 = arith.constant 0 : i32
    %c0_i32_1 = arith.constant 0 : i32
    return %c0_i32, %c0_i32_0 : i32, i32
  }
  func.func @transform_9(%arg0: i32) -> (i32, i32) {
    %c0_i32 = arith.constant 0 : i32
    %c0_i32_0 = arith.constant 0 : i32
    return %arg0, %c0_i32 : i32, i32
  }
}

</mosaic_0001>

<llo_original>
// kernel: sinet_pallas.1
$region0: #{sinet_pallas.1}
  #allocation0 [shape = 'u32[]', space=smem, size = 0x4, offset = 0x4, fixed_abs, tag = 'smem constant byte address 0x4 - core index']
  #allocation1 [shape = 'u32[144,128]{1,0:T(1,128)}', space=vmem, size = 0x12000, scoped, tag = 'internal scratch']
  %s0 = inlined_call_operand.vmem [shape: bf16[48,128], index: 0, kind: input, shape index: {}]
  %s1 = inlined_call_operand.vmem [shape: bf16[128,128], index: 1, kind: input, shape index: {}]
  %s2 = inlined_call_operand.vmem [shape: f32[1,128], index: 2, kind: input, shape index: {}]
  %s3 = inlined_call_operand.vmem [shape: bf16[128,256], index: 3, kind: input, shape index: {}]
  %s4 = inlined_call_operand.vmem [shape: f32[1,256], index: 4, kind: input, shape index: {}]
  %s5 = inlined_call_operand.vmem [shape: bf16[256,256], index: 5, kind: input, shape index: {}]
  %s6 = inlined_call_operand.vmem [shape: f32[1,256], index: 6, kind: input, shape index: {}]
  %s7 = inlined_call_operand.vmem [shape: bf16[256,128], index: 7, kind: input, shape index: {}]
  %s8 = inlined_call_operand.vmem [shape: f32[1,128], index: 8, kind: input, shape index: {}]
  %s9 = inlined_call_operand.vmem [shape: f32[48,128], index: 9, kind: output, shape index: {}]
  %s10 = sld [smem:[#allocation0]]
  $region69: #{sinet_pallas.1} parent=0
    _
  %s12 = ssub.s32 1, %s10
  %s13 = scalar_select 0, %s12, %s10
  loop: start=0, step=1, limit=4
  $region2: #{sinet_pallas.1} parent=0 // loop_pre_header
    _
  $region3: #{sinet_pallas.1} parent=0 // loop_header
    %s15 = sphi 0, %s19
    %p16 = scmp.ge.s32.totalorder %s15, 4
    %s25 = sphi 0, %s27
    %s28 = sphi 0, %s25
    %s29 = sphi 0, %s28
    %s45 = sphi 0, %s29
    %s49 = sphi 0, %s49
    %s51 = sphi 0, %s49
    %s52 = sphi 0, %s51
    %s66 = sphi 0, %s52
    %s70 = sphi 0, %s70
    %s72 = sphi 0, %s70
    %s73 = sphi 0, %s72
    %s87 = sphi 0, %s73
    %s91 = sphi 0, %s91
    %s93 = sphi 0, %s91
    %s94 = sphi 0, %s93
    %s108 = sphi 0, %s94
    %s112 = sphi 0, %s112
    %s114 = sphi 0, %s112
    %s115 = sphi 0, %s114
    %s129 = sphi 0, %s115
    %s133 = sphi 0, %s133
    %s135 = sphi 0, %s133
    %s136 = sphi 0, %s135
    %s150 = sphi 0, %s136
    %s154 = sphi 0, %s154
    %s156 = sphi 0, %s154
    %s157 = sphi 0, %s156
    %s171 = sphi 0, %s157
    %s175 = sphi 0, %s175
    %s177 = sphi 0, %s175
    %s178 = sphi 0, %s177
    %s192 = sphi 0, %s178
    %s196 = sphi 0, %s196
    %s198 = sphi 0, %s196
    %s199 = sphi 0, %s198
    %s213 = sphi 0, %s199
    %s219 = sphi 0, %s221
    %s222 = sphi 0, %s219
    %s223 = sphi 0, %s222
    %s239 = sphi 0, %s223
  $region4: #{sinet_pallas.1} parent=0 // loop_header_branch
    %18 = sbr.rel (%p16) target = $region8
  $region5: #{sinet_pallas.1} parent=0 // loop_body
    %s20 = ssub.s32 %s15, 1
    %s21 = ssub.s32 %s15, 2
    %s22 = sadd.s32 %s15, 1
    %s23 = ssub.s32 %s15, %s22
    %p24 = scmp.eq.s32.totalorder %s23, 0
    %s26 = sadd.s32 %s25, 1
    %s27 = scalar_select %p24, %s25, %s26
    %p30 = pneg %p24
    %p31 = scmp.eq.s32.totalorder %s15, 1
    %p32 = por %p30, %p31
    %p33 = scmp.ne.s32.totalorder %s25, %s28
    %p34 = scmp.eq.s32.totalorder %s15, 0
    %p35 = por %p33, %p34
    %p36 = scmp.ne.s32.totalorder %s25, %s28
    %p37 = scmp.eq.s32.totalorder %s20, 1
    %p38 = por %p36, %p37
    %p39 = scmp.ne.s32.totalorder %s28, %s29
    %p40 = scmp.eq.s32.totalorder %s20, 0
    %p41 = por %p39, %p40
    %p42 = scmp.ne.s32.totalorder %s28, %s29
    %p43 = scmp.eq.s32.totalorder %s21, 1
    %p44 = por %p42, %p43
    %p46 = scmp.ne.s32.totalorder %s29, %s45
    %p47 = scmp.eq.s32.totalorder %s21, 0
    %p48 = por %p46, %p47
    %s50 = sadd.s32 %s49, 1
    %p53 = scmp.eq.s32.totalorder %s15, 1
    %p54 = scmp.ne.s32.totalorder %s49, %s51
    %p55 = scmp.eq.s32.totalorder %s15, 0
    %p56 = por %p54, %p55
    %p57 = scmp.ne.s32.totalorder %s49, %s51
    %p58 = scmp.eq.s32.totalorder %s20, 1
    %p59 = por %p57, %p58
    %p60 = scmp.ne.s32.totalorder %s51, %s52
    %p61 = scmp.eq.s32.totalorder %s20, 0
    %p62 = por %p60, %p61
    %p63 = scmp.ne.s32.totalorder %s51, %s52
    %p64 = scmp.eq.s32.totalorder %s21, 1
    %p65 = por %p63, %p64
    %p67 = scmp.ne.s32.totalorder %s52, %s66
    %p68 = scmp.eq.s32.totalorder %s21, 0
    %p69 = por %p67, %p68
    %s71 = sadd.s32 %s70, 1
    %p74 = scmp.eq.s32.totalorder %s15, 1
    %p75 = scmp.ne.s32.totalorder %s70, %s72
    %p76 = scmp.eq.s32.totalorder %s15, 0
    %p77 = por %p75, %p76
    %p78 = scmp.ne.s32.totalorder %s70, %s72
    %p79 = scmp.eq.s32.totalorder %s20, 1
    %p80 = por %p78, %p79
    %p81 = scmp.ne.s32.totalorder %s72, %s73
    %p82 = scmp.eq.s32.totalorder %s20, 0
    %p83 = por %p81, %p82
    %p84 = scmp.ne.s32.totalorder %s72, %s73
    %p85 = scmp.eq.s32.totalorder %s21, 1
    %p86 = por %p84, %p85
    %p88 = scmp.ne.s32.totalorder %s73, %s87
    %p89 = scmp.eq.s32.totalorder %s21, 0
    %p90 = por %p88, %p89
    %s92 = sadd.s32 %s91, 1
    %p95 = scmp.eq.s32.totalorder %s15, 1
    %p96 = scmp.ne.s32.totalorder %s91, %s93
    %p97 = scmp.eq.s32.totalorder %s15, 0
    %p98 = por %p96, %p97
    %p99 = scmp.ne.s32.totalorder %s91, %s93
    %p100 = scmp.eq.s32.totalorder %s20, 1
    %p101 = por %p99, %p100
    %p102 = scmp.ne.s32.totalorder %s93, %s94
    %p103 = scmp.eq.s32.totalorder %s20, 0
    %p104 = por %p102, %p103
    %p105 = scmp.ne.s32.totalorder %s93, %s94
    %p106 = scmp.eq.s32.totalorder %s21, 1
    %p107 = por %p105, %p106
    %p109 = scmp.ne.s32.totalorder %s94, %s108
    %p110 = scmp.eq.s32.totalorder %s21, 0
    %p111 = por %p109, %p110
    %s113 = sadd.s32 %s112, 1
    %p116 = scmp.eq.s32.totalorder %s15, 1
    %p117 = scmp.ne.s32.totalorder %s112, %s114
    %p118 = scmp.eq.s32.totalorder %s15, 0
    %p119 = por %p117, %p118
    %p120 = scmp.ne.s32.totalorder %s112, %s114
    %p121 = scmp.eq.s32.totalorder %s20, 1
    %p122 = por %p120, %p121
    %p123 = scmp.ne.s32.totalorder %s114, %s115
    %p124 = scmp.eq.s32.totalorder %s20, 0
    %p125 = por %p123, %p124
    %p126 = scmp.ne.s32.totalorder %s114, %s115
    %p127 = scmp.eq.s32.totalorder %s21, 1
    %p128 = por %p126, %p127
    %p130 = scmp.ne.s32.totalorder %s115, %s129
    %p131 = scmp.eq.s32.totalorder %s21, 0
    %p132 = por %p130, %p131
    %s134 = sadd.s32 %s133, 1
    %p137 = scmp.eq.s32.totalorder %s15, 1
    %p138 = scmp.ne.s32.totalorder %s133, %s135
    %p139 = scmp.eq.s32.totalorder %s15, 0
    %p140 = por %p138, %p139
    %p141 = scmp.ne.s32.totalorder %s133, %s135
    %p142 = scmp.eq.s32.totalorder %s20, 1
    %p143 = por %p141, %p142
    %p144 = scmp.ne.s32.totalorder %s135, %s136
    %p145 = scmp.eq.s32.totalorder %s20, 0
    %p146 = por %p144, %p145
    %p147 = scmp.ne.s32.totalorder %s135, %s136
    %p148 = scmp.eq.s32.totalorder %s21, 1
    %p149 = por %p147, %p148
    %p151 = scmp.ne.s32.totalorder %s136, %s150
    %p152 = scmp.eq.s32.totalorder %s21, 0
    %p153 = por %p151, %p152
    %s155 = sadd.s32 %s154, 1
    %p158 = scmp.eq.s32.totalorder %s15, 1
    %p159 = scmp.ne.s32.totalorder %s154, %s156
    %p160 = scmp.eq.s32.totalorder %s15, 0
    %p161 = por %p159, %p160
    %p162 = scmp.ne.s32.totalorder %s154, %s156
    %p163 = scmp.eq.s32.totalorder %s20, 1
    %p164 = por %p162, %p163
    %p165 = scmp.ne.s32.totalorder %s156, %s157
    %p166 = scmp.eq.s32.totalorder %s20, 0
    %p167 = por %p165, %p166
    %p168 = scmp.ne.s32.totalorder %s156, %s157
    %p169 = scmp.eq.s32.totalorder %s21, 1
    %p170 = por %p168, %p169
    %p172 = scmp.ne.s32.totalorder %s157, %s171
    %p173 = scmp.eq.s32.totalorder %s21, 0
    %p174 = por %p172, %p173
    %s176 = sadd.s32 %s175, 1
    %p179 = scmp.eq.s32.totalorder %s15, 1
    %p180 = scmp.ne.s32.totalorder %s175, %s177
    %p181 = scmp.eq.s32.totalorder %s15, 0
    %p182 = por %p180, %p181
    %p183 = scmp.ne.s32.totalorder %s175, %s177
    %p184 = scmp.eq.s32.totalorder %s20, 1
    %p185 = por %p183, %p184
    %p186 = scmp.ne.s32.totalorder %s177, %s178
    %p187 = scmp.eq.s32.totalorder %s20, 0
    %p188 = por %p186, %p187
    %p189 = scmp.ne.s32.totalorder %s177, %s178
    %p190 = scmp.eq.s32.totalorder %s21, 1
    %p191 = por %p189, %p190
    %p193 = scmp.ne.s32.totalorder %s178, %s192
    %p194 = scmp.eq.s32.totalorder %s21, 0
    %p195 = por %p193, %p194
    %s197 = sadd.s32 %s196, 1
    %p200 = scmp.eq.s32.totalorder %s15, 1
    %p201 = scmp.ne.s32.totalorder %s196, %s198
    %p202 = scmp.eq.s32.totalorder %s15, 0
    %p203 = por %p201, %p202
    %p204 = scmp.ne.s32.totalorder %s196, %s198
    %p205 = scmp.eq.s32.totalorder %s20, 1
    %p206 = por %p204, %p205
    %p207 = scmp.ne.s32.totalorder %s198, %s199
    %p208 = scmp.eq.s32.totalorder %s20, 0
    %p209 = por %p207, %p208
    %p210 = scmp.ne.s32.totalorder %s198, %s199
    %p211 = scmp.eq.s32.totalorder %s21, 1
    %p212 = por %p210, %p211
    %p214 = scmp.ne.s32.totalorder %s199, %s213
    %p215 = scmp.eq.s32.totalorder %s21, 0
    %p216 = por %p214, %p215
    %s217 = ssub.s32 %s15, %s22
    %p218 = scmp.eq.s32.totalorder %s217, 0
    %s220 = sadd.s32 %s219, 1
    %s221 = scalar_select %p218, %s219, %s220
    %p224 = pneg %p218
    %p225 = scmp.eq.s32.totalorder %s15, 1
    %p226 = por %p224, %p225
    %p227 = scmp.ne.s32.totalorder %s219, %s222
    %p228 = scmp.eq.s32.totalorder %s15, 0
    %p229 = por %p227, %p228
    %p230 = scmp.ne.s32.totalorder %s219, %s222
    %p231 = scmp.eq.s32.totalorder %s20, 1
    %p232 = por %p230, %p231
    %p233 = scmp.ne.s32.totalorder %s222, %s223
    %p234 = scmp.eq.s32.totalorder %s20, 0
    %p235 = por %p233, %p234
    %p236 = scmp.ne.s32.totalorder %s222, %s223
    %p237 = scmp.eq.s32.totalorder %s21, 1
    %p238 = por %p236, %p237
    %p240 = scmp.ne.s32.totalorder %s223, %s239
    %p241 = scmp.eq.s32.totalorder %s21, 0
    %p242 = por %p240, %p241
    %p243 = scmp.le.s32.totalorder 1, %s15
    %p244 = scmp.lt.s32.totalorder %s15, 3
    %p245 = pnand %p243, %p244
    %p246 = pneg %p245
    // Predicated region
    $region9: #{sinet_pallas.1} parent=5 // pred_check
      _
    $region10: #{sinet_pallas.1} parent=5 // pred_check_branch
      %248 = sbr.rel (%p245) target = $region12
    $region11: #{sinet_pallas.1} parent=5 // pred_region
      %s249 = ssub.s32 %s15, 1
      // Predicated region
      $region13: #{sinet_pallas.1} parent=11 // pred_check
        %p250 = pneg %p62
      $region14: #{sinet_pallas.1} parent=11 // pred_check_branch
        %252 = sbr.rel (%p250) target = $region16
      $region15: #{sinet_pallas.1} parent=11 // pred_region
        _
      $region16: #{sinet_pallas.1} parent=11 // pred_fallthru
        _
      // Predicated region
      $region17: #{sinet_pallas.1} parent=11 // pred_check
        %p253 = pneg %p83
      $region18: #{sinet_pallas.1} parent=11 // pred_check_branch
        %255 = sbr.rel (%p253) target = $region20
      $region19: #{sinet_pallas.1} parent=11 // pred_region
        _
      $region20: #{sinet_pallas.1} parent=11 // pred_fallthru
        _
      // Predicated region
      $region21: #{sinet_pallas.1} parent=11 // pred_check
        %p256 = pneg %p104
      $region22: #{sinet_pallas.1} parent=11 // pred_check_branch
        %258 = sbr.rel (%p256) target = $region24
      $region23: #{sinet_pallas.1} parent=11 // pred_region
        _
      $region24: #{sinet_pallas.1} parent=11 // pred_fallthru
        _
      // Predicated region
      $region25: #{sinet_pallas.1} parent=11 // pred_check
        %p259 = pneg %p125
      $region26: #{sinet_pallas.1} parent=11 // pred_check_branch
        %261 = sbr.rel (%p259) target = $region28
      $region27: #{sinet_pallas.1} parent=11 // pred_region
        _
      $region28: #{sinet_pallas.1} parent=11 // pred_fallthru
        _
      // Predicated region
      $region29: #{sinet_pallas.1} parent=11 // pred_check
        %p262 = pneg %p146
      $region30: #{sinet_pallas.1} parent=11 // pred_check_branch
        %264 = sbr.rel (%p262) target = $region32
      $region31: #{sinet_pallas.1} parent=11 // pred_region
        _
      $region32: #{sinet_pallas.1} parent=11 // pred_fallthru
        _
      // Predicated region
      $region33: #{sinet_pallas.1} parent=11 // pred_check
        %p265 = pneg %p167
      $region34: #{sinet_pallas.1} parent=11 // pred_check_branch
        %267 = sbr.rel (%p265) target = $region36
      $region35: #{sinet_pallas.1} parent=11 // pred_region
        _
      $region36: #{sinet_pallas.1} parent=11 // pred_fallthru
        _
      // Predicated region
      $region37: #{sinet_pallas.1} parent=11 // pred_check
        %p268 = pneg %p188
      $region38: #{sinet_pallas.1} parent=11 // pred_check_branch
        %270 = sbr.rel (%p268) target = $region40
      $region39: #{sinet_pallas.1} parent=11 // pred_region
        _
      $region40: #{sinet_pallas.1} parent=11 // pred_fallthru
        _
      // Predicated region
      $region41: #{sinet_pallas.1} parent=11 // pred_check
        %p271 = pneg %p209
      $region42: #{sinet_pallas.1} parent=11 // pred_check_branch
        %273 = sbr.rel (%p271) target = $region44
      $region43: #{sinet_pallas.1} parent=11 // pred_region
        _
      $region44: #{sinet_pallas.1} parent=11 // pred_fallthru
        _
    $region12: #{sinet_pallas.1} parent=5 // pred_fallthru
      _
    %p274 = scmp.lt.s32.totalorder %s15, 2
    // Predicated region
    $region45: #{sinet_pallas.1} parent=5 // pred_check
      %p275 = pneg %p274
    $region46: #{sinet_pallas.1} parent=5 // pred_check_branch
      %277 = sbr.rel (%p275) target = $region48
    $region47: #{sinet_pallas.1} parent=5 // pred_region
      // Predicated region
      $region49: #{sinet_pallas.1} parent=47 // pred_check
        %p278 = pneg %p35
      $region50: #{sinet_pallas.1} parent=47 // pred_check_branch
        %280 = sbr.rel (%p278) target = $region52
      $region51: #{sinet_pallas.1} parent=47 // pred_region
        %s281 = smul.u32 3, %s15
        %p282 = scmp.lt.s32.totalorder %s281, 5
        %s283 = scalar_select %p282, %s281, 5
        %s284 = smul.addr %s283, 4
        %s285 = scalar_lea.vmem %s0, %s284
        %s286 = smul.u32 3, %s15
      $region52: #{sinet_pallas.1} parent=47 // pred_fallthru
        _
    $region48: #{sinet_pallas.1} parent=5 // pred_fallthru
      _
    %p287 = scmp.le.s32.totalorder 1, %s15
    %p288 = scmp.lt.s32.totalorder %s15, 3
    %p289 = pnand %p287, %p288
    %p290 = pneg %p289
    // Predicated region
    $region53: #{sinet_pallas.1} parent=5 // pred_check
      _
    $region54: #{sinet_pallas.1} parent=5 // pred_check_branch
      %292 = sbr.rel (%p289) target = $region56
    $region55: #{sinet_pallas.1} parent=5 // pred_region
      %s293 = ssub.s32 %s15, 1
      %s294 = smul.u32 3, %s20
      %p295 = scmp.lt.s32.totalorder %s294, 5
      %s296 = scalar_select %p295, %s294, 5
      %s297 = smul.addr %s296, 4
      %s298 = scalar_lea.vmem %s0, %s297
      %p299 = pneg %p41
      %p300 = pneg %p38
      %p301 = pneg %p62
      %p302 = pneg %p59
      %p303 = pneg %p83
      %p304 = pneg %p80
      %p305 = pneg %p104
      %p306 = pneg %p101
      %p307 = pneg %p125
      %p308 = pneg %p122
      %p309 = pneg %p146
      %p310 = pneg %p143
      %p311 = pneg %p167
      %p312 = pneg %p164
      %p313 = pneg %p188
      %p314 = pneg %p185
      %p315 = pneg %p209
      %p316 = pneg %p206
      %p317 = pneg %p235
      %p318 = pneg %p232
      %s319 = smul.u32 3, %s20
      %p320 = scmp.lt.s32.totalorder %s319, 5
      %s321 = scalar_select %p320, %s319, 5
      %s322 = smul.addr %s321, 8
      %s323 = scalar_lea.vmem %s9, %s322
      %s324 = smul.u32 3, %s20
      %p325 = scmp.lt.s32.totalorder %s324, 5
      %s326 = scalar_select %p325, %s324, 5
      %s327 = smul.addr %s326, 4
      %s328 = scalar_lea.vmem %s0, %s327
      %s329 = smul.u32 3, %s20
      %s330 = smul.u32 3, %s20
      %p331 = scmp.lt.s32.totalorder %s330, 5
      %s332 = scalar_select %p331, %s330, 5
      %s333 = smul.addr %s332, 8
      %s334 = scalar_lea.vmem %s9, %s333
      %s335 = smul.u32 3, %s20
      %v337 = vld [vmem:[%s2] sm:$0x1]
      %v338 = vld [vmem:[%s4] sm:$0x3]
      %v339 = vld [vmem:[%s6] sm:$0x3]
      %v340 = vld [vmem:[%s8] sm:$0x1]
      %v341 = vld [vmem:[%s328] sm:$0xf]
      %v342 = vld [vmem:[%s328 + $0x4] sm:$0xf]
      %v343 = vld [vmem:[%s328 + $0x8] sm:$0xf]
      %v344 = vld [vmem:[%s1] sm:$0xf]
      %v345 = vld [vmem:[%s1 + $0x4] sm:$0xf]
      %v346 = vld [vmem:[%s1 + $0x8] sm:$0xf]
      %v347 = vld [vmem:[%s1 + $0xc] sm:$0xf]
      %v348 = vld [vmem:[%s1 + $0x10] sm:$0xf]
      %v349 = vld [vmem:[%s1 + $0x14] sm:$0xf]
      %v350 = vld [vmem:[%s1 + $0x18] sm:$0xf]
      %v351 = vld [vmem:[%s1 + $0x1c] sm:$0xf]
      %v352 = vld [vmem:[%s1 + $0x20] sm:$0xf]
      %v353 = vld [vmem:[%s1 + $0x24] sm:$0xf]
      %v354 = vld [vmem:[%s1 + $0x28] sm:$0xf]
      %v355 = vld [vmem:[%s1 + $0x2c] sm:$0xf]
      %v356 = vld [vmem:[%s1 + $0x30] sm:$0xf]
      %v357 = vld [vmem:[%s1 + $0x34] sm:$0xf]
      %v358 = vld [vmem:[%s1 + $0x38] sm:$0xf]
      %v359 = vld [vmem:[%s1 + $0x3c] sm:$0xf]
      %v361 = vlaneseq
      %v362 = vshrl.u32 %v361, 7
      %v363 = vsub.s32 0, %v362
      %v364 = vrot.slane %v337, %v363
      %v369 = vunpack.c.l.b16 %v341
      %v370 = vunpack.c.l.b16 %v342
      %v371 = vunpack.c.l.b16 %v343
      %v372 = vpack.c.b16 %v370, %v369
      %v373 = vpack.c.b16 %v371, %v371
      %v392 = vunpack.c.l.b16 %v344
      %v393 = vunpack.c.l.b16 %v345
      %v394 = vunpack.c.l.b16 %v346
      %v395 = vunpack.c.l.b16 %v347
      %v396 = vunpack.c.l.b16 %v348
      %v397 = vunpack.c.l.b16 %v349
      %v398 = vunpack.c.l.b16 %v350
      %v399 = vunpack.c.l.b16 %v351
      %v400 = vunpack.c.l.b16 %v352
      %v401 = vunpack.c.l.b16 %v353
      %v402 = vunpack.c.l.b16 %v354
      %v403 = vunpack.c.l.b16 %v355
      %v404 = vunpack.c.l.b16 %v356
      %v405 = vunpack.c.l.b16 %v357
      %v406 = vunpack.c.l.b16 %v358
      %v407 = vunpack.c.l.b16 %v359
      %v408 = vpack.c.b16 %v393, %v392
      %v409 = vpack.c.b16 %v395, %v394
      %v410 = vpack.c.b16 %v397, %v396
      %v411 = vpack.c.b16 %v399, %v398
      %v412 = vpack.c.b16 %v401, %v400
      %v413 = vpack.c.b16 %v403, %v402
      %v414 = vpack.c.b16 %v405, %v404
      %v415 = vpack.c.b16 %v407, %v406
      %424 = vmatprep.subr.bf16.mxu0 0
      %425 = vmatpush1.bf16.msra.mxu0 %v415
      %426 = vmatprep.subr.bf16.mxu0 0
      %427 = vmatpush1.bf16.msra.mxu0 %v414
      %428 = vmatprep.subr.bf16.mxu0 0
      %429 = vmatpush1.bf16.msra.mxu0 %v413
      %430 = vmatprep.subr.bf16.mxu0 0
      %431 = vmatpush1.bf16.msra.mxu0 %v412
      %432 = vmatprep.subr.bf16.mxu0 0
      %433 = vmatpush1.bf16.msra.mxu0 %v411
      %434 = vmatprep.subr.bf16.mxu0 0
      %435 = vmatpush1.bf16.msra.mxu0 %v410
      %436 = vmatprep.subr.bf16.mxu0 0
      %437 = vmatpush1.bf16.msra.mxu0 %v409
      %438 = vmatprep.subr.bf16.mxu0 0
      %439 = vmatpush1.bf16.msra.mxu0 %v408
      %440 = vmatprep.subr.bf16.mxu0 0
      %441 = vmatpush2.bf16.msra.mxu0 0
      %442 = vmatprep.subr.bf16.mxu0 0
      %443 = vmatpush2.bf16.msra.mxu0 0
      %444 = vmatprep.subr.bf16.mxu0 0
      %445 = vmatpush2.bf16.msra.mxu0 0
      %446 = vmatprep.subr.bf16.mxu0 0
      %447 = vmatpush2.bf16.msra.mxu0 0
      %448 = vmatprep.subr.bf16.mxu0 0
      %449 = vmatpush2.bf16.msra.mxu0 0
      %450 = vmatprep.subr.bf16.mxu0 0
      %451 = vmatpush2.bf16.msra.mxu0 0
      %452 = vmatprep.subr.bf16.mxu0 0
      %453 = vmatpush2.bf16.msra.mxu0 0
      %454 = vmatprep.subr.bf16.mxu0 0
      %455 = vmatpush2.bf16.msra.mxu0 0
      %456 = vmatprep.mubr.bf16.mxu0 0
      %457 = vmatmul.mubr.bf16.gmra.mxu0 %v372
      %v458 = vpop.f32.mrf.mxu0
      %v459 = vadd.f32 %v364, %v458
      %v460 = vpop.f32.mrf.mxu0
      %v461 = vpop.f32.mrf.mxu0
      %v462 = vadd.f32 %v364, %v461
      %v463 = vpop.f32.mrf.mxu0
      %464 = vmatprep.mubr.bf16.mxu0 0
      %465 = vmatmul.mubr.bf16.gmra.mxu0 %v373
      %v466 = vpop.f32.mrf.mxu0
      %v467 = vadd.f32 %v364, %v466
      %v468 = vpop.f32.mrf.mxu0
      %v469 = vpop.f32.mrf.mxu0
      %v470 = vpop.f32.mrf.mxu0
      %471 = vdwg.mxu0
      %v472 = vmul.f32 %v459, 0.5
      %v473 = vmul.f32 %v462, 0.5
      %v474 = vmul.f32 %v467, 0.5
      %v475 = vmul.f32 %v459, %v459
      %v476 = vmul.f32 %v462, %v462
      %v477 = vmul.f32 %v467, %v467
      %v478 = vmul.f32 %v475, %v459
      %v479 = vmul.f32 %v476, %v462
      %v480 = vmul.f32 %v477, %v467
      %v481 = vmul.f32 %v478, 0.044715
      %v482 = vmul.f32 %v479, 0.044715
      %v483 = vmul.f32 %v480, 0.044715
      %v484 = vadd.f32 %v459, %v481
      %v485 = vadd.f32 %v462, %v482
      %v486 = vadd.f32 %v467, %v483
      %v487 = vmul.f32 %v484, 0.7978846
      %v488 = vmul.f32 %v485, 0.7978846
      %v489 = vmul.f32 %v486, 0.7978846
      %v490 = vtanh.pop %v487
      %v491 = vtanh.pop %v488
      %v492 = vtanh.pop %v489
      %v493 = vadd.f32 %v490, 1.0
      %v494 = vadd.f32 %v491, 1.0
      %v495 = vadd.f32 %v492, 1.0
      %v496 = vmul.f32 %v472, %v493
      %v497 = vmul.f32 %v473, %v494
      %v498 = vmul.f32 %v474, %v495
      %v499 = vpack.c.bf16 %v497, %v496
      %v500 = vpack.c.bf16 %v498, %v498
      %v501 = vld [vmem:[%s3] sm:$0xff]
      %v502 = vld [vmem:[%s3 + $0x8] sm:$0xff]
      %v503 = vld [vmem:[%s3 + $0x10] sm:$0xff]
      %v504 = vld [vmem:[%s3 + $0x18] sm:$0xff]
      %v505 = vld [vmem:[%s3 + $0x20] sm:$0xff]
      %v506 = vld [vmem:[%s3 + $0x28] sm:$0xff]
      %v507 = vld [vmem:[%s3 + $0x30] sm:$0xff]
      %v508 = vld [vmem:[%s3 + $0x38] sm:$0xff]
      %v509 = vld [vmem:[%s3 + $0x40] sm:$0xff]
      %v510 = vld [vmem:[%s3 + $0x48] sm:$0xff]
      %v511 = vld [vmem:[%s3 + $0x50] sm:$0xff]
      %v512 = vld [vmem:[%s3 + $0x58] sm:$0xff]
      %v513 = vld [vmem:[%s3 + $0x60] sm:$0xff]
      %v514 = vld [vmem:[%s3 + $0x68] sm:$0xff]
      %v515 = vld [vmem:[%s3 + $0x70] sm:$0xff]
      %v516 = vld [vmem:[%s3 + $0x78] sm:$0xff]
      %v518 = vlaneseq
      %v519 = vshrl.u32 %v518, 7
      %v520 = vsub.s32 0, %v519
      %v521 = vrot.slane %v338, %v520
      %v522 = vlaneseq
      %v523 = vshrl.u32 %v522, 7
      %v524 = vsub.s32 1, %v523
      %v525 = vrot.slane %v338, %v524
      %v544 = vunpack.c.l.b16 %v501
      %v545 = vunpack.c.h.b16 %v501
      %v546 = vunpack.c.l.b16 %v502
      %v547 = vunpack.c.h.b16 %v502
      %v548 = vunpack.c.l.b16 %v503
      %v549 = vunpack.c.h.b16 %v503
      %v550 = vunpack.c.l.b16 %v504
      %v551 = vunpack.c.h.b16 %v504
      %v552 = vunpack.c.l.b16 %v505
      %v553 = vunpack.c.h.b16 %v505
      %v554 = vunpack.c.l.b16 %v506
      %v555 = vunpack.c.h.b16 %v506
      %v556 = vunpack.c.l.b16 %v507
      %v557 = vunpack.c.h.b16 %v507
      %v558 = vunpack.c.l.b16 %v508
      %v559 = vunpack.c.h.b16 %v508
      %v560 = vunpack.c.l.b16 %v509
      %v561 = vunpack.c.h.b16 %v509
      %v562 = vunpack.c.l.b16 %v510
      %v563 = vunpack.c.h.b16 %v510
      %v564 = vunpack.c.l.b16 %v511
      %v565 = vunpack.c.h.b16 %v511
      %v566 = vunpack.c.l.b16 %v512
      %v567 = vunpack.c.h.b16 %v512
      %v568 = vunpack.c.l.b16 %v513
      %v569 = vunpack.c.h.b16 %v513
      %v570 = vunpack.c.l.b16 %v514
      %v571 = vunpack.c.h.b16 %v514
      %v572 = vunpack.c.l.b16 %v515
      %v573 = vunpack.c.h.b16 %v515
      %v574 = vunpack.c.l.b16 %v516
      %v575 = vunpack.c.h.b16 %v516
      %v576 = vpack.c.b16 %v546, %v544
      %v577 = vpack.c.b16 %v547, %v545
      %v578 = vpack.c.b16 %v550, %v548
      %v579 = vpack.c.b16 %v551, %v549
      %v580 = vpack.c.b16 %v554, %v552
      %v581 = vpack.c.b16 %v555, %v553
      %v582 = vpack.c.b16 %v558, %v556
      %v583 = vpack.c.b16 %v559, %v557
      %v584 = vpack.c.b16 %v562, %v560
      %v585 = vpack.c.b16 %v563, %v561
      %v586 = vpack.c.b16 %v566, %v564
      %v587 = vpack.c.b16 %v567, %v565
      %v588 = vpack.c.b16 %v570, %v568
      %v589 = vpack.c.b16 %v571, %v569
      %v590 = vpack.c.b16 %v574, %v572
      %v591 = vpack.c.b16 %v575, %v573
      %608 = vmatprep.subr.bf16.mxu0 %v591
      %609 = vmatpush1.bf16.msra.mxu0 %v590
      %610 = vmatprep.subr.bf16.mxu0 %v589
      %611 = vmatpush1.bf16.msra.mxu0 %v588
      %612 = vmatprep.subr.bf16.mxu0 %v587
      %613 = vmatpush1.bf16.msra.mxu0 %v586
      %614 = vmatprep.subr.bf16.mxu0 %v585
      %615 = vmatpush1.bf16.msra.mxu0 %v584
      %616 = vmatprep.subr.bf16.mxu0 %v583
      %617 = vmatpush1.bf16.msra.mxu0 %v582
      %618 = vmatprep.subr.bf16.mxu0 %v581
      %619 = vmatpush1.bf16.msra.mxu0 %v580
      %620 = vmatprep.subr.bf16.mxu0 %v579
      %621 = vmatpush1.bf16.msra.mxu0 %v578
      %622 = vmatprep.subr.bf16.mxu0 %v577
      %623 = vmatpush1.bf16.msra.mxu0 %v576
      %624 = vmatprep.subr.bf16.mxu0 0
      %625 = vmatpush2.bf16.msra.mxu0 0
      %626 = vmatprep.subr.bf16.mxu0 0
      %627 = vmatpush2.bf16.msra.mxu0 0
      %628 = vmatprep.subr.bf16.mxu0 0
      %629 = vmatpush2.bf16.msra.mxu0 0
      %630 = vmatprep.subr.bf16.mxu0 0
      %631 = vmatpush2.bf16.msra.mxu0 0
      %632 = vmatprep.subr.bf16.mxu0 0
      %633 = vmatpush2.bf16.msra.mxu0 0
      %634 = vmatprep.subr.bf16.mxu0 0
      %635 = vmatpush2.bf16.msra.mxu0 0
      %636 = vmatprep.subr.bf16.mxu0 0
      %637 = vmatpush2.bf16.msra.mxu0 0
      %638 = vmatprep.subr.bf16.mxu0 0
      %639 = vmatpush2.bf16.msra.mxu0 0
      %640 = vmatprep.mubr.bf16.mxu0 0
      %641 = vmatmul.mubr.bf16.gmra.mxu0 %v499
      %v642 = vpop.f32.mrf.mxu0
      %v643 = vadd.f32 %v521, %v642
      %v644 = vpop.f32.mrf.mxu0
      %v645 = vadd.f32 %v525, %v644
      %v646 = vpop.f32.mrf.mxu0
      %v647 = vadd.f32 %v521, %v646
      %v648 = vpop.f32.mrf.mxu0
      %v649 = vadd.f32 %v525, %v648
      %650 = vmatprep.mubr.bf16.mxu0 0
      %651 = vmatmul.mubr.bf16.gmra.mxu0 %v500
      %v652 = vpop.f32.mrf.mxu0
      %v653 = vadd.f32 %v521, %v652
      %v654 = vpop.f32.mrf.mxu0
      %v655 = vadd.f32 %v525, %v654
      %v656 = vpop.f32.mrf.mxu0
      %v657 = vpop.f32.mrf.mxu0
      %658 = vdwg.mxu0
      %v659 = vmul.f32 %v643, 0.5
      %v660 = vmul.f32 %v645, 0.5
      %v661 = vmul.f32 %v647, 0.5
      %v662 = vmul.f32 %v649, 0.5
      %v663 = vmul.f32 %v653, 0.5
      %v664 = vmul.f32 %v655, 0.5
      %v665 = vmul.f32 %v643, %v643
      %v666 = vmul.f32 %v645, %v645
      %v667 = vmul.f32 %v647, %v647
      %v668 = vmul.f32 %v649, %v649
      %v669 = vmul.f32 %v653, %v653
      %v670 = vmul.f32 %v655, %v655
      %v671 = vmul.f32 %v665, %v643
      %v672 = vmul.f32 %v666, %v645
      %v673 = vmul.f32 %v667, %v647
      %v674 = vmul.f32 %v668, %v649
      %v675 = vmul.f32 %v669, %v653
      %v676 = vmul.f32 %v670, %v655
      %v677 = vmul.f32 %v671, 0.044715
      %v678 = vmul.f32 %v672, 0.044715
      %v679 = vmul.f32 %v673, 0.044715
      %v680 = vmul.f32 %v674, 0.044715
      %v681 = vmul.f32 %v675, 0.044715
      %v682 = vmul.f32 %v676, 0.044715
      %v683 = vadd.f32 %v643, %v677
      %v684 = vadd.f32 %v645, %v678
      %v685 = vadd.f32 %v647, %v679
      %v686 = vadd.f32 %v649, %v680
      %v687 = vadd.f32 %v653, %v681
      %v688 = vadd.f32 %v655, %v682
      %v689 = vmul.f32 %v683, 0.7978846
      %v690 = vmul.f32 %v684, 0.7978846
      %v691 = vmul.f32 %v685, 0.7978846
      %v692 = vmul.f32 %v686, 0.7978846
      %v693 = vmul.f32 %v687, 0.7978846
      %v694 = vmul.f32 %v688, 0.7978846
      %v695 = vtanh.pop %v689
      %v696 = vtanh.pop %v690
      %v697 = vtanh.pop %v691
      %v698 = vtanh.pop %v692
      %v699 = vtanh.pop %v693
      %v700 = vtanh.pop %v694
      %v701 = vadd.f32 %v695, 1.0
      %v702 = vadd.f32 %v696, 1.0
      %v703 = vadd.f32 %v697, 1.0
      %v704 = vadd.f32 %v698, 1.0
      %v705 = vadd.f32 %v699, 1.0
      %v706 = vadd.f32 %v700, 1.0
      %v707 = vmul.f32 %v659, %v701
      %v708 = vmul.f32 %v660, %v702
      %v709 = vmul.f32 %v661, %v703
      %v710 = vmul.f32 %v662, %v704
      %v711 = vmul.f32 %v663, %v705
      %v712 = vmul.f32 %v664, %v706
      %v713 = vpack.c.bf16 %v709, %v707
      %v714 = vpack.c.bf16 %v710, %v708
      %v715 = vpack.c.bf16 %v711, %v711
      %v716 = vpack.c.bf16 %v712, %v712
      %v717 = vld [vmem:[%s5] sm:$0xff]
      %v718 = vld [vmem:[%s5 + $0x8] sm:$0xff]
      %v719 = vld [vmem:[%s5 + $0x10] sm:$0xff]
      %v720 = vld [vmem:[%s5 + $0x18] sm:$0xff]
      %v721 = vld [vmem:[%s5 + $0x20] sm:$0xff]
      %v722 = vld [vmem:[%s5 + $0x28] sm:$0xff]
      %v723 = vld [vmem:[%s5 + $0x30] sm:$0xff]
      %v724 = vld [vmem:[%s5 + $0x38] sm:$0xff]
      %v725 = vld [vmem:[%s5 + $0x40] sm:$0xff]
      %v726 = vld [vmem:[%s5 + $0x48] sm:$0xff]
      %v727 = vld [vmem:[%s5 + $0x50] sm:$0xff]
      %v728 = vld [vmem:[%s5 + $0x58] sm:$0xff]
      %v729 = vld [vmem:[%s5 + $0x60] sm:$0xff]
      %v730 = vld [vmem:[%s5 + $0x68] sm:$0xff]
      %v731 = vld [vmem:[%s5 + $0x70] sm:$0xff]
      %v732 = vld [vmem:[%s5 + $0x78] sm:$0xff]
      %v733 = vld [vmem:[%s5 + $0x80] sm:$0xff]
      %v734 = vld [vmem:[%s5 + $0x88] sm:$0xff]
      %v735 = vld [vmem:[%s5 + $0x90] sm:$0xff]
      %v736 = vld [vmem:[%s5 + $0x98] sm:$0xff]
      %v737 = vld [vmem:[%s5 + $0xa0] sm:$0xff]
      %v738 = vld [vmem:[%s5 + $0xa8] sm:$0xff]
      %v739 = vld [vmem:[%s5 + $0xb0] sm:$0xff]
      %v740 = vld [vmem:[%s5 + $0xb8] sm:$0xff]
      %v741 = vld [vmem:[%s5 + $0xc0] sm:$0xff]
      %v742 = vld [vmem:[%s5 + $0xc8] sm:$0xff]
      %v743 = vld [vmem:[%s5 + $0xd0] sm:$0xff]
      %v744 = vld [vmem:[%s5 + $0xd8] sm:$0xff]
      %v745 = vld [vmem:[%s5 + $0xe0] sm:$0xff]
      %v746 = vld [vmem:[%s5 + $0xe8] sm:$0xff]
      %v747 = vld [vmem:[%s5 + $0xf0] sm:$0xff]
      %v748 = vld [vmem:[%s5 + $0xf8] sm:$0xff]
      %v750 = vlaneseq
      %v751 = vshrl.u32 %v750, 7
      %v752 = vsub.s32 0, %v751
      %v753 = vrot.slane %v339, %v752
      %v754 = vlaneseq
      %v755 = vshrl.u32 %v754, 7
      %v756 = vsub.s32 1, %v755
      %v757 = vrot.slane %v339, %v756
      %v792 = vunpack.c.l.b16 %v717
      %v793 = vunpack.c.h.b16 %v717
      %v794 = vunpack.c.l.b16 %v718
      %v795 = vunpack.c.h.b16 %v718
      %v796 = vunpack.c.l.b16 %v719
      %v797 = vunpack.c.h.b16 %v719
      %v798 = vunpack.c.l.b16 %v720
      %v799 = vunpack.c.h.b16 %v720
      %v800 = vunpack.c.l.b16 %v721
      %v801 = vunpack.c.h.b16 %v721
      %v802 = vunpack.c.l.b16 %v722
      %v803 = vunpack.c.h.b16 %v722
      %v804 = vunpack.c.l.b16 %v723
      %v805 = vunpack.c.h.b16 %v723
      %v806 = vunpack.c.l.b16 %v724
      %v807 = vunpack.c.h.b16 %v724
      %v808 = vunpack.c.l.b16 %v725
      %v809 = vunpack.c.h.b16 %v725
      %v810 = vunpack.c.l.b16 %v726
      %v811 = vunpack.c.h.b16 %v726
      %v812 = vunpack.c.l.b16 %v727
      %v813 = vunpack.c.h.b16 %v727
      %v814 = vunpack.c.l.b16 %v728
      %v815 = vunpack.c.h.b16 %v728
      %v816 = vunpack.c.l.b16 %v729
      %v817 = vunpack.c.h.b16 %v729
      %v818 = vunpack.c.l.b16 %v730
      %v819 = vunpack.c.h.b16 %v730
      %v820 = vunpack.c.l.b16 %v731
      %v821 = vunpack.c.h.b16 %v731
      %v822 = vunpack.c.l.b16 %v732
      %v823 = vunpack.c.h.b16 %v732
      %v824 = vunpack.c.l.b16 %v733
      %v825 = vunpack.c.h.b16 %v733
      %v826 = vunpack.c.l.b16 %v734
      %v827 = vunpack.c.h.b16 %v734
      %v828 = vunpack.c.l.b16 %v735
      %v829 = vunpack.c.h.b16 %v735
      %v830 = vunpack.c.l.b16 %v736
      %v831 = vunpack.c.h.b16 %v736
      %v832 = vunpack.c.l.b16 %v737
      %v833 = vunpack.c.h.b16 %v737
      %v834 = vunpack.c.l.b16 %v738
      %v835 = vunpack.c.h.b16 %v738
      %v836 = vunpack.c.l.b16 %v739
      %v837 = vunpack.c.h.b16 %v739
      %v838 = vunpack.c.l.b16 %v740
      %v839 = vunpack.c.h.b16 %v740
      %v840 = vunpack.c.l.b16 %v741
      %v841 = vunpack.c.h.b16 %v741
      %v842 = vunpack.c.l.b16 %v742
      %v843 = vunpack.c.h.b16 %v742
      %v844 = vunpack.c.l.b16 %v743
      %v845 = vunpack.c.h.b16 %v743
      %v846 = vunpack.c.l.b16 %v744
      %v847 = vunpack.c.h.b16 %v744
      %v848 = vunpack.c.l.b16 %v745
      %v849 = vunpack.c.h.b16 %v745
      %v850 = vunpack.c.l.b16 %v746
      %v851 = vunpack.c.h.b16 %v746
      %v852 = vunpack.c.l.b16 %v747
      %v853 = vunpack.c.h.b16 %v747
      %v854 = vunpack.c.l.b16 %v748
      %v855 = vunpack.c.h.b16 %v748
      %v856 = vpack.c.b16 %v794, %v792
      %v857 = vpack.c.b16 %v795, %v793
      %v858 = vpack.c.b16 %v798, %v796
      %v859 = vpack.c.b16 %v799, %v797
      %v860 = vpack.c.b16 %v802, %v800
      %v861 = vpack.c.b16 %v803, %v801
      %v862 = vpack.c.b16 %v806, %v804
      %v863 = vpack.c.b16 %v807, %v805
      %v864 = vpack.c.b16 %v810, %v808
      %v865 = vpack.c.b16 %v811, %v809
      %v866 = vpack.c.b16 %v814, %v812
      %v867 = vpack.c.b16 %v815, %v813
      %v868 = vpack.c.b16 %v818, %v816
      %v869 = vpack.c.b16 %v819, %v817
      %v870 = vpack.c.b16 %v822, %v820
      %v871 = vpack.c.b16 %v823, %v821
      %v872 = vpack.c.b16 %v826, %v824
      %v873 = vpack.c.b16 %v827, %v825
      %v874 = vpack.c.b16 %v830, %v828
      %v875 = vpack.c.b16 %v831, %v829
      %v876 = vpack.c.b16 %v834, %v832
      %v877 = vpack.c.b16 %v835, %v833
      %v878 = vpack.c.b16 %v838, %v836
      %v879 = vpack.c.b16 %v839, %v837
      %v880 = vpack.c.b16 %v842, %v840
      %v881 = vpack.c.b16 %v843, %v841
      %v882 = vpack.c.b16 %v846, %v844
      %v883 = vpack.c.b16 %v847, %v845
      %v884 = vpack.c.b16 %v850, %v848
      %v885 = vpack.c.b16 %v851, %v849
      %v886 = vpack.c.b16 %v854, %v852
      %v887 = vpack.c.b16 %v855, %v853
      %920 = vmatprep.subr.bf16.mxu0 %v871
      %921 = vmatpush1.bf16.msra.mxu0 %v870
      %922 = vmatprep.subr.bf16.mxu0 %v869
      %923 = vmatpush1.bf16.msra.mxu0 %v868
      %924 = vmatprep.subr.bf16.mxu0 %v867
      %925 = vmatpush1.bf16.msra.mxu0 %v866
      %926 = vmatprep.subr.bf16.mxu0 %v865
      %927 = vmatpush1.bf16.msra.mxu0 %v864
      %928 = vmatprep.subr.bf16.mxu0 %v863
      %929 = vmatpush1.bf16.msra.mxu0 %v862
      %930 = vmatprep.subr.bf16.mxu0 %v861
      %931 = vmatpush1.bf16.msra.mxu0 %v860
      %932 = vmatprep.subr.bf16.mxu0 %v859
      %933 = vmatpush1.bf16.msra.mxu0 %v858
      %934 = vmatprep.subr.bf16.mxu0 %v857
      %935 = vmatpush1.bf16.msra.mxu0 %v856
      %936 = vmatprep.subr.bf16.mxu0 %v887
      %937 = vmatpush2.bf16.msra.mxu0 %v886
      %938 = vmatprep.subr.bf16.mxu0 %v885
      %939 = vmatpush2.bf16.msra.mxu0 %v884
      %940 = vmatprep.subr.bf16.mxu0 %v883
      %941 = vmatpush2.bf16.msra.mxu0 %v882
      %942 = vmatprep.subr.bf16.mxu0 %v881
      %943 = vmatpush2.bf16.msra.mxu0 %v880
      %944 = vmatprep.subr.bf16.mxu0 %v879
      %945 = vmatpush2.bf16.msra.mxu0 %v878
      %946 = vmatprep.subr.bf16.mxu0 %v877
      %947 = vmatpush2.bf16.msra.mxu0 %v876
      %948 = vmatprep.subr.bf16.mxu0 %v875
      %949 = vmatpush2.bf16.msra.mxu0 %v874
      %950 = vmatprep.subr.bf16.mxu0 %v873
      %951 = vmatpush2.bf16.msra.mxu0 %v872
      %952 = vmatprep.mubr.bf16.mxu0 %v714
      %953 = vmatmul.mubr.bf16.gmra.mxu0 %v713
      %v954 = vpop.f32.mrf.mxu0
      %v955 = vadd.f32 %v753, %v954
      %v956 = vpop.f32.mrf.mxu0
      %v957 = vadd.f32 %v757, %v956
      %v958 = vpop.f32.mrf.mxu0
      %v959 = vadd.f32 %v753, %v958
      %v960 = vpop.f32.mrf.mxu0
      %v961 = vadd.f32 %v757, %v960
      %962 = vmatprep.mubr.bf16.mxu0 %v716
      %963 = vmatmul.mubr.bf16.gmra.mxu0 %v715
      %v964 = vpop.f32.mrf.mxu0
      %v965 = vadd.f32 %v753, %v964
      %v966 = vpop.f32.mrf.mxu0
      %v967 = vadd.f32 %v757, %v966
      %v968 = vpop.f32.mrf.mxu0
      %v969 = vpop.f32.mrf.mxu0
      %970 = vdwg.mxu0
      %v971 = vmul.f32 %v955, 0.5
      %v972 = vmul.f32 %v957, 0.5
      %v973 = vmul.f32 %v959, 0.5
      %v974 = vmul.f32 %v961, 0.5
      %v975 = vmul.f32 %v965, 0.5
      %v976 = vmul.f32 %v967, 0.5
      %v977 = vmul.f32 %v955, %v955
      %v978 = vmul.f32 %v957, %v957
      %v979 = vmul.f32 %v959, %v959
      %v980 = vmul.f32 %v961, %v961
      %v981 = vmul.f32 %v965, %v965
      %v982 = vmul.f32 %v967, %v967
      %v983 = vmul.f32 %v977, %v955
      %v984 = vmul.f32 %v978, %v957
      %v985 = vmul.f32 %v979, %v959
      %v986 = vmul.f32 %v980, %v961
      %v987 = vmul.f32 %v981, %v965
      %v988 = vmul.f32 %v982, %v967
      %v989 = vmul.f32 %v983, 0.044715
      %v990 = vmul.f32 %v984, 0.044715
      %v991 = vmul.f32 %v985, 0.044715
      %v992 = vmul.f32 %v986, 0.044715
      %v993 = vmul.f32 %v987, 0.044715
      %v994 = vmul.f32 %v988, 0.044715
      %v995 = vadd.f32 %v955, %v989
      %v996 = vadd.f32 %v957, %v990
      %v997 = vadd.f32 %v959, %v991
      %v998 = vadd.f32 %v961, %v992
      %v999 = vadd.f32 %v965, %v993
      %v1000 = vadd.f32 %v967, %v994
      %v1001 = vmul.f32 %v995, 0.7978846
      %v1002 = vmul.f32 %v996, 0.7978846
      %v1003 = vmul.f32 %v997, 0.7978846
      %v1004 = vmul.f32 %v998, 0.7978846
      %v1005 = vmul.f32 %v999, 0.7978846
      %v1006 = vmul.f32 %v1000, 0.7978846
      %v1007 = vtanh.pop %v1001
      %v1008 = vtanh.pop %v1002
      %v1009 = vtanh.pop %v1003
      %v1010 = vtanh.pop %v1004
      %v1011 = vtanh.pop %v1005
      %v1012 = vtanh.pop %v1006
      %v1013 = vadd.f32 %v1007, 1.0
      %v1014 = vadd.f32 %v1008, 1.0
      %v1015 = vadd.f32 %v1009, 1.0
      %v1016 = vadd.f32 %v1010, 1.0
      %v1017 = vadd.f32 %v1011, 1.0
      %v1018 = vadd.f32 %v1012, 1.0
      %v1019 = vmul.f32 %v971, %v1013
      %v1020 = vmul.f32 %v972, %v1014
      %v1021 = vmul.f32 %v973, %v1015
      %v1022 = vmul.f32 %v974, %v1016
      %v1023 = vmul.f32 %v975, %v1017
      %v1024 = vmul.f32 %v976, %v1018
      %v1025 = vpack.c.bf16 %v1021, %v1019
      %v1026 = vpack.c.bf16 %v1022, %v1020
      %v1027 = vpack.c.bf16 %v1023, %v1023
      %v1028 = vpack.c.bf16 %v1024, %v1024
      %v1029 = vld [vmem:[%s7] sm:$0xf]
      %v1030 = vld [vmem:[%s7 + $0x4] sm:$0xf]
      %v1031 = vld [vmem:[%s7 + $0x8] sm:$0xf]
      %v1032 = vld [vmem:[%s7 + $0xc] sm:$0xf]
      %v1033 = vld [vmem:[%s7 + $0x10] sm:$0xf]
      %v1034 = vld [vmem:[%s7 + $0x14] sm:$0xf]
      %v1035 = vld [vmem:[%s7 + $0x18] sm:$0xf]
      %v1036 = vld [vmem:[%s7 + $0x1c] sm:$0xf]
      %v1037 = vld [vmem:[%s7 + $0x20] sm:$0xf]
      %v1038 = vld [vmem:[%s7 + $0x24] sm:$0xf]
      %v1039 = vld [vmem:[%s7 + $0x28] sm:$0xf]
      %v1040 = vld [vmem:[%s7 + $0x2c] sm:$0xf]
      %v1041 = vld [vmem:[%s7 + $0x30] sm:$0xf]
      %v1042 = vld [vmem:[%s7 + $0x34] sm:$0xf]
      %v1043 = vld [vmem:[%s7 + $0x38] sm:$0xf]
      %v1044 = vld [vmem:[%s7 + $0x3c] sm:$0xf]
      %v1045 = vld [vmem:[%s7 + $0x40] sm:$0xf]
      %v1046 = vld [vmem:[%s7 + $0x44] sm:$0xf]
      %v1047 = vld [vmem:[%s7 + $0x48] sm:$0xf]
      %v1048 = vld [vmem:[%s7 + $0x4c] sm:$0xf]
      %v1049 = vld [vmem:[%s7 + $0x50] sm:$0xf]
      %v1050 = vld [vmem:[%s7 + $0x54] sm:$0xf]
      %v1051 = vld [vmem:[%s7 + $0x58] sm:$0xf]
      %v1052 = vld [vmem:[%s7 + $0x5c] sm:$0xf]
      %v1053 = vld [vmem:[%s7 + $0x60] sm:$0xf]
      %v1054 = vld [vmem:[%s7 + $0x64] sm:$0xf]
      %v1055 = vld [vmem:[%s7 + $0x68] sm:$0xf]
      %v1056 = vld [vmem:[%s7 + $0x6c] sm:$0xf]
      %v1057 = vld [vmem:[%s7 + $0x70] sm:$0xf]
      %v1058 = vld [vmem:[%s7 + $0x74] sm:$0xf]
      %v1059 = vld [vmem:[%s7 + $0x78] sm:$0xf]
      %v1060 = vld [vmem:[%s7 + $0x7c] sm:$0xf]
      %v1062 = vlaneseq
      %v1063 = vshrl.u32 %v1062, 7
      %v1064 = vsub.s32 0, %v1063
      %v1065 = vrot.slane %v340, %v1064
      %v1099 = vunpack.c.l.b16 %v1029
      %v1100 = vunpack.c.l.b16 %v1030
      %v1101 = vunpack.c.l.b16 %v1031
      %v1102 = vunpack.c.l.b16 %v1032
      %v1103 = vunpack.c.l.b16 %v1033
      %v1104 = vunpack.c.l.b16 %v1034
      %v1105 = vunpack.c.l.b16 %v1035
      %v1106 = vunpack.c.l.b16 %v1036
      %v1107 = vunpack.c.l.b16 %v1037
      %v1108 = vunpack.c.l.b16 %v1038
      %v1109 = vunpack.c.l.b16 %v1039
      %v1110 = vunpack.c.l.b16 %v1040
      %v1111 = vunpack.c.l.b16 %v1041
      %v1112 = vunpack.c.l.b16 %v1042
      %v1113 = vunpack.c.l.b16 %v1043
      %v1114 = vunpack.c.l.b16 %v1044
      %v1115 = vunpack.c.l.b16 %v1045
      %v1116 = vunpack.c.l.b16 %v1046
      %v1117 = vunpack.c.l.b16 %v1047
      %v1118 = vunpack.c.l.b16 %v1048
      %v1119 = vunpack.c.l.b16 %v1049
      %v1120 = vunpack.c.l.b16 %v1050
      %v1121 = vunpack.c.l.b16 %v1051
      %v1122 = vunpack.c.l.b16 %v1052
      %v1123 = vunpack.c.l.b16 %v1053
      %v1124 = vunpack.c.l.b16 %v1054
      %v1125 = vunpack.c.l.b16 %v1055
      %v1126 = vunpack.c.l.b16 %v1056
      %v1127 = vunpack.c.l.b16 %v1057
      %v1128 = vunpack.c.l.b16 %v1058
      %v1129 = vunpack.c.l.b16 %v1059
      %v1130 = vunpack.c.l.b16 %v1060
      %v1131 = vpack.c.b16 %v1100, %v1099
      %v1132 = vpack.c.b16 %v1102, %v1101
      %v1133 = vpack.c.b16 %v1104, %v1103
      %v1134 = vpack.c.b16 %v1106, %v1105
      %v1135 = vpack.c.b16 %v1108, %v1107
      %v1136 = vpack.c.b16 %v1110, %v1109
      %v1137 = vpack.c.b16 %v1112, %v1111
      %v1138 = vpack.c.b16 %v1114, %v1113
      %v1139 = vpack.c.b16 %v1116, %v1115
      %v1140 = vpack.c.b16 %v1118, %v1117
      %v1141 = vpack.c.b16 %v1120, %v1119
      %v1142 = vpack.c.b16 %v1122, %v1121
      %v1143 = vpack.c.b16 %v1124, %v1123
      %v1144 = vpack.c.b16 %v1126, %v1125
      %v1145 = vpack.c.b16 %v1128, %v1127
      %v1146 = vpack.c.b16 %v1130, %v1129
      %1163 = vmatprep.subr.bf16.mxu0 0
      %1164 = vmatpush1.bf16.msra.mxu0 %v1138
      %1165 = vmatprep.subr.bf16.mxu0 0
      %1166 = vmatpush1.bf16.msra.mxu0 %v1137
      %1167 = vmatprep.subr.bf16.mxu0 0
      %1168 = vmatpush1.bf16.msra.mxu0 %v1136
      %1169 = vmatprep.subr.bf16.mxu0 0
      %1170 = vmatpush1.bf16.msra.mxu0 %v1135
      %1171 = vmatprep.subr.bf16.mxu0 0
      %1172 = vmatpush1.bf16.msra.mxu0 %v1134
      %1173 = vmatprep.subr.bf16.mxu0 0
      %1174 = vmatpush1.bf16.msra.mxu0 %v1133
      %1175 = vmatprep.subr.bf16.mxu0 0
      %1176 = vmatpush1.bf16.msra.mxu0 %v1132
      %1177 = vmatprep.subr.bf16.mxu0 0
      %1178 = vmatpush1.bf16.msra.mxu0 %v1131
      %1179 = vmatprep.subr.bf16.mxu0 0
      %1180 = vmatpush2.bf16.msra.mxu0 %v1146
      %1181 = vmatprep.subr.bf16.mxu0 0
      %1182 = vmatpush2.bf16.msra.mxu0 %v1145
      %1183 = vmatprep.subr.bf16.mxu0 0
      %1184 = vmatpush2.bf16.msra.mxu0 %v1144
      %1185 = vmatprep.subr.bf16.mxu0 0
      %1186 = vmatpush2.bf16.msra.mxu0 %v1143
      %1187 = vmatprep.subr.bf16.mxu0 0
      %1188 = vmatpush2.bf16.msra.mxu0 %v1142
      %1189 = vmatprep.subr.bf16.mxu0 0
      %1190 = vmatpush2.bf16.msra.mxu0 %v1141
      %1191 = vmatprep.subr.bf16.mxu0 0
      %1192 = vmatpush2.bf16.msra.mxu0 %v1140
      %1193 = vmatprep.subr.bf16.mxu0 0
      %1194 = vmatpush2.bf16.msra.mxu0 %v1139
      %1195 = vmatprep.mubr.bf16.mxu0 %v1026
      %1196 = vmatmul.mubr.bf16.gmra.mxu0 %v1025
      %v1197 = vpop.f32.mrf.mxu0
      %v1198 = vadd.f32 %v1065, %v1197
      %v1199 = vpop.f32.mrf.mxu0
      %v1200 = vpop.f32.mrf.mxu0
      %v1201 = vadd.f32 %v1065, %v1200
      %v1202 = vpop.f32.mrf.mxu0
      %1203 = vmatprep.mubr.bf16.mxu0 %v1028
      %1204 = vmatmul.mubr.bf16.gmra.mxu0 %v1027
      %v1205 = vpop.f32.mrf.mxu0
      %v1206 = vadd.f32 %v1065, %v1205
      %v1207 = vpop.f32.mrf.mxu0
      %v1208 = vpop.f32.mrf.mxu0
      %v1209 = vpop.f32.mrf.mxu0
      %1210 = vdwg.mxu0
      %v1211 = vadd.f32 %v459, %v1198
      %v1212 = vadd.f32 %v462, %v1201
      %v1213 = vadd.f32 %v467, %v1206
      %1214 = vst [vmem:[%s334] sm:$0xff] %v1211
      %1215 = vst [vmem:[%s334 + $0x8] sm:$0xff] %v1212
      %1216 = vst [vmem:[%s334 + $0x10] sm:$0xff] %v1213
      %s1217 = smul.u32 3, %s20
      %p1218 = scmp.lt.s32.totalorder %s1217, 5
      %s1219 = scalar_select %p1218, %s1217, 5
      %s1220 = smul.addr %s1219, 8
      %s1221 = scalar_lea.vmem %s9, %s1220
      // Predicated region
      $region57: #{sinet_pallas.1} parent=55 // pred_check
        %p1222 = pneg %p232
      $region58: #{sinet_pallas.1} parent=55 // pred_check_branch
        %1224 = sbr.rel (%p1222) target = $region60
      $region59: #{sinet_pallas.1} parent=55 // pred_region
        %s1225 = smul.u32 3, %s20
      $region60: #{sinet_pallas.1} parent=55 // pred_fallthru
        _
    $region56: #{sinet_pallas.1} parent=5 // pred_fallthru
      _
    %p1226 = scmp.le.s32.totalorder 2, %s15
    // Predicated region
    $region61: #{sinet_pallas.1} parent=5 // pred_check
      %p1227 = pneg %p1226
    $region62: #{sinet_pallas.1} parent=5 // pred_check_branch
      %1229 = sbr.rel (%p1227) target = $region64
    $region63: #{sinet_pallas.1} parent=5 // pred_region
      %s1230 = ssub.s32 %s15, 2
      // Predicated region
      $region65: #{sinet_pallas.1} parent=63 // pred_check
        %p1231 = pneg %p238
      $region66: #{sinet_pallas.1} parent=63 // pred_check_branch
        %1233 = sbr.rel (%p1231) target = $region68
      $region67: #{sinet_pallas.1} parent=63 // pred_region
        %s1234 = smul.u32 3, %s21
        %p1235 = scmp.lt.s32.totalorder %s1234, 5
        %s1236 = scalar_select %p1235, %s1234, 5
        %s1237 = smul.addr %s1236, 8
        %s1238 = scalar_lea.vmem %s9, %s1237
      $region68: #{sinet_pallas.1} parent=63 // pred_fallthru
        _
    $region64: #{sinet_pallas.1} parent=5 // pred_fallthru
      _
  $region6: #{sinet_pallas.1} parent=0 // loop_footer
    %s19 = sadd.s32 1, %s15
  $region7: #{sinet_pallas.1} parent=0 // loop_footer_branch
    %14 = sbr.rel target = $region3
  $region8: #{sinet_pallas.1} parent=0 // loop_exit
    _

</llo_original>
